<compile_context>
chip_gen: v5e
topology: v5e:2x2
jax: 0.10.0
libtpu: 0.0.40
codegen_flags: <defaults>
</compile_context>

<pallas_src>
import functools

import jax
import jax.numpy as jnp
from jax.experimental import pallas as pl
from jax.experimental.pallas import tpu as pltpu


def _round_up(x: int, m: int) -> int:
    return ((x + m - 1) // m) * m


def _gaussian_smearing_kernel(dist_ref, offset_ref, out_ref, *, coeff):
    # dist_ref:   (tile, 1)  VMEM column of edge distances
    # offset_ref: (1, G)     VMEM Gaussian centers (same block every grid step)
    # out_ref:    (tile, G)  VMEM output tile
    diff = dist_ref[...] - offset_ref[...]                       # broadcast -> (tile, G)
    out_ref[...] = jnp.exp(jnp.float32(coeff) * (diff * diff)).astype(out_ref.dtype)


def gaussian_smearing(dist, offset, coeff, *, tile_e=1024, out_dtype=jnp.float32):
    """dist: (E,), offset: (G,) -> (E, G) out_dtype with out = exp(coeff*(d-off)^2)."""
    E = int(dist.shape[0])
    G = int(offset.shape[0])

    dist2d = dist.astype(jnp.float32).reshape(E, 1)      # glue reshapes in plain JAX
    offset2d = offset.astype(jnp.float32).reshape(1, G)

    # Row tile: multiple of 8 (sublane constraint), hard cap 4096 (the (tile,1)
    # dist block is lane-padded to (tile,128) in VMEM), no larger than the problem.
    tile = max(8, min(int(tile_e), 4096))
    tile = min(tile, _round_up(E, 8))
    # For large E keep >= ~8 grid steps so "parallel" can shard across v7x's 2 TCs.
    if E >= 8 * 512:
        tile = min(tile, max(512, _round_up(pl.cdiv(E, 8), 8)))
    tile = _round_up(tile, 8)

    grid = (pl.cdiv(E, tile),)   # ragged final block: padded loads, masked stores

    # VMEM budget: 2 pipeline buffers x (lane-padded dist block + out block) + offset.
    lane = 128
    g_pad = _round_up(G, lane)
    block_bytes = tile * lane * 4 + tile * g_pad * 4
    vmem_limit = min(max(2 * block_bytes + 2 * 8 * g_pad * 4 + (2 << 20), 8 << 20),
                     48 << 20)

    kernel = functools.partial(_gaussian_smearing_kernel, coeff=float(coeff))

    return pl.pallas_call(
        kernel,
        out_shape=jax.ShapeDtypeStruct((E, G), out_dtype),
        grid_spec=pltpu.PrefetchScalarGridSpec(
            num_scalar_prefetch=0,
            grid=grid,
            in_specs=[
                pl.BlockSpec((tile, 1), lambda i: (i, 0)),   # dist column tile
                pl.BlockSpec((1, G), lambda i: (0, 0)),      # full offset row
            ],
            out_specs=pl.BlockSpec((tile, G), lambda i: (i, 0)),
        ),
        compiler_params=pltpu.CompilerParams(
            dimension_semantics=("parallel",),
            vmem_limit_bytes=vmem_limit,
        ),
    )(dist2d, offset2d)


class GaussianSmearingJAX:
    """Deterministic re-implementation of the PyTorch module's __init__ + forward."""

    def __init__(self, start: float = 0.0, stop: float = 5.0, num_gaussians: int = 50,
                 tile_e: int = 1024, out_dtype=jnp.float32):
        self.offset = jnp.linspace(start, stop, num_gaussians, dtype=jnp.float32)
        # Same as torch: -0.5 / (offset[1] - offset[0])**2  (requires num_gaussians >= 2,
        # stop != start -- matches the PyTorch module's implicit preconditions).
        step = float(self.offset[1] - self.offset[0])
        self.coeff = -0.5 / step ** 2
        self.tile_e = tile_e
        self.out_dtype = out_dtype

    def __call__(self, dist):
        return gaussian_smearing(dist, self.offset, self.coeff,
                                 tile_e=self.tile_e, out_dtype=self.out_dtype)


if __name__ == "__main__":
    module = GaussianSmearingJAX(start=0.0, stop=5.0, num_gaussians=50)

    def ref_fn(d):
        return jnp.exp(module.coeff * (d.reshape(-1, 1) - module.offset.reshape(1, -1)) ** 2)

    # Case 1: small, module-consistent shape (E = 64 edge distances, 50 gaussians).
    E = 64
    dist = jax.random.uniform(jax.random.PRNGKey(0), (E,), dtype=jnp.float32,
                              minval=0.0, maxval=5.0)
    out = jax.block_until_ready(module(dist))
    assert out.shape == (E, 50)
    assert jnp.allclose(out, ref_fn(dist), atol=1e-5, rtol=1e-5)

    # Case 2: E not a multiple of 8 -> exercises the ragged final block (no pad/slice).
    E2 = 100
    dist2 = jax.random.uniform(jax.random.PRNGKey(1), (E2,), dtype=jnp.float32,
                               minval=0.0, maxval=5.0)
    out2 = jax.block_until_ready(module(dist2))
    assert out2.shape == (E2, 50)
    assert jnp.allclose(out2, ref_fn(dist2), atol=1e-5, rtol=1e-5)

    print("KERNEL_OK")
</pallas_src>

<mosaic_0001>
module attributes {stable_mosaic.version = 11 : i64} {
  func.func @_gaussian_smearing_kernel(%arg0: i32, %arg1: memref<64x1xf32, #tpu.memory_space<vmem>>, %arg2: memref<1x50xf32, #tpu.memory_space<vmem>>, %arg3: memref<64x50xf32, #tpu.memory_space<vmem>>) attributes {dimension_semantics = [#tpu.dimension_semantics<parallel>], iteration_bounds = array<i64: 1>, scalar_prefetch = 0 : i64, scratch_operands = 0 : i64, tpu.core_type = #tpu.core_type<tc>, window_params = [{transform_indices = @transform_0, window_bounds = array<i64: 64, 1>}, {pipeline_mode = #tpu.pipeline_mode<synchronous>, transform_indices = @transform_1, window_bounds = array<i64: 1, 50>}, {transform_indices = @transform_2, window_bounds = array<i64: 64, 50>}]} {
    %c0 = arith.constant 0 : index
    %c0_0 = arith.constant 0 : index
    %0 = vector.load %arg1[%c0, %c0_0] : memref<64x1xf32, #tpu.memory_space<vmem>>, vector<64x1xf32>
    %c0_1 = arith.constant 0 : index
    %c0_2 = arith.constant 0 : index
    %1 = vector.load %arg2[%c0_1, %c0_2] : memref<1x50xf32, #tpu.memory_space<vmem>>, vector<1x50xf32>
    %2 = vector.broadcast %0 : vector<64x1xf32> to vector<64x50xf32>
    %3 = vector.broadcast %1 : vector<1x50xf32> to vector<64x50xf32>
    %4 = arith.subf %2, %3 : vector<64x50xf32>
    %5 = arith.mulf %4, %4 : vector<64x50xf32>
    %cst = arith.constant -48.0200043 : f32
    %6 = vector.broadcast %cst : f32 to vector<64x50xf32>
    %7 = arith.mulf %6, %5 : vector<64x50xf32>
    %8 = math.exp %7 : vector<64x50xf32>
    %c0_3 = arith.constant 0 : index
    %c0_4 = arith.constant 0 : index
    %9 = vector.load %arg3[%c0_3, %c0_4] : memref<64x50xf32, #tpu.memory_space<vmem>>, vector<64x50xf32>
    tpu.vector_store %arg3[%c0_3, %c0_4], %8 {strides = array<i32>} : memref<64x50xf32, #tpu.memory_space<vmem>>, vector<64x50xf32>,
    return
  }
  func.func @transform_0(%arg0: i32) -> (i32, i32) {
    %c0_i32 = arith.constant 0 : i32
    %c0_i32_0 = arith.constant 0 : i32
    return %arg0, %c0_i32 : i32, i32
  }
  func.func @transform_1(%arg0: i32) -> (i32, i32) {
    %c0_i32 = arith.constant 0 : i32
    %c0_i32_0 = arith.constant 0 : i32
    %c0_i32_1 = arith.constant 0 : i32
    return %c0_i32, %c0_i32_0 : i32, i32
  }
  func.func @transform_2(%arg0: i32) -> (i32, i32) {
    %c0_i32 = arith.constant 0 : i32
    %c0_i32_0 = arith.constant 0 : i32
    return %arg0, %c0_i32 : i32, i32
  }
}

</mosaic_0001>

<llo_original>
// kernel: tpu_custom_call.1
$region0: #{tpu_custom_call.1}
  #allocation0 [shape = 'u32[]', space=smem, size = 0x4, offset = 0x4, fixed_abs, tag = 'smem constant byte address 0x4 - core index']
  #allocation1 [shape = 'u32[72,128]{1,0:T(1,128)}', space=vmem, size = 0x9000, scoped, tag = 'internal scratch']
  %s0 = inlined_call_operand.vmem [shape: f32[64,1], index: 0, kind: input, shape index: {}]
  %s1 = inlined_call_operand.vmem [shape: f32[1,50], index: 1, kind: input, shape index: {}]
  %s2 = inlined_call_operand.vmem [shape: f32[64,50], index: 2, kind: output, shape index: {}]
  %s3 = sld [smem:[#allocation0]]
  $region18: #{tpu_custom_call.1} parent=0
    _
  %s5 = ssub.s32 1, %s3
  %s6 = scalar_select 0, %s5, %s3
  // Predicated region
  $region2: #{tpu_custom_call.1} parent=0 // pred_check
    _
  $region3: #{tpu_custom_call.1} parent=0 // pred_check_branch
    %8 = sbr.rel (0) target = $region5
  $region4: #{tpu_custom_call.1} parent=0 // pred_region
    _
  $region5: #{tpu_custom_call.1} parent=0 // pred_fallthru
    _
  // Predicated region
  $region6: #{tpu_custom_call.1} parent=0 // pred_check
    _
  $region7: #{tpu_custom_call.1} parent=0 // pred_check_branch
    %10 = sbr.rel (0) target = $region9
  $region8: #{tpu_custom_call.1} parent=0 // pred_region
    _
  $region9: #{tpu_custom_call.1} parent=0 // pred_fallthru
    _
  %v11 = vld [vmem:[%s0] sm:$0xff]
  %v12 = vld [vmem:[%s0 + $0x8] sm:$0xff]
  %v13 = vld [vmem:[%s0 + $0x10] sm:$0xff]
  %v14 = vld [vmem:[%s0 + $0x18] sm:$0xff]
  %v15 = vld [vmem:[%s0 + $0x20] sm:$0xff]
  %v16 = vld [vmem:[%s0 + $0x28] sm:$0xff]
  %v17 = vld [vmem:[%s0 + $0x30] sm:$0xff]
  %v18 = vld [vmem:[%s0 + $0x38] sm:$0xff]
  %v19 = vld [vmem:[%s1] sm:$0x1]
  %21 = vset.pattern.permute.xlu0 0
  %22 = vperm.xlu0 %21, %v11
  %v23 = vpop.permute.xlu0 %22
  %26 = vset.pattern.permute.xlu0 0
  %27 = vperm.xlu0 %26, %v12
  %v28 = vpop.permute.xlu0 %27
  %31 = vset.pattern.permute.xlu0 0
  %32 = vperm.xlu0 %31, %v13
  %v33 = vpop.permute.xlu0 %32
  %36 = vset.pattern.permute.xlu0 0
  %37 = vperm.xlu0 %36, %v14
  %v38 = vpop.permute.xlu0 %37
  %41 = vset.pattern.permute.xlu0 0
  %42 = vperm.xlu0 %41, %v15
  %v43 = vpop.permute.xlu0 %42
  %46 = vset.pattern.permute.xlu0 0
  %47 = vperm.xlu0 %46, %v16
  %v48 = vpop.permute.xlu0 %47
  %51 = vset.pattern.permute.xlu0 0
  %52 = vperm.xlu0 %51, %v17
  %v53 = vpop.permute.xlu0 %52
  %56 = vset.pattern.permute.xlu0 0
  %57 = vperm.xlu0 %56, %v18
  %v58 = vpop.permute.xlu0 %57
  %v61 = vperm.slane %v19, 0
  %v63 = vsub.f32 %v23, %v61
  %v64 = vsub.f32 %v28, %v61
  %v65 = vsub.f32 %v33, %v61
  %v66 = vsub.f32 %v38, %v61
  %v67 = vsub.f32 %v43, %v61
  %v68 = vsub.f32 %v48, %v61
  %v69 = vsub.f32 %v53, %v61
  %v70 = vsub.f32 %v58, %v61
  %v71 = vmul.f32 %v63, %v63
  %v72 = vmul.f32 %v64, %v64
  %v73 = vmul.f32 %v65, %v65
  %v74 = vmul.f32 %v66, %v66
  %v75 = vmul.f32 %v67, %v67
  %v76 = vmul.f32 %v68, %v68
  %v77 = vmul.f32 %v69, %v69
  %v78 = vmul.f32 %v70, %v70
  %v79 = vmul.f32 %v71, -48.020004
  %v80 = vmul.f32 %v72, -48.020004
  %v81 = vmul.f32 %v73, -48.020004
  %v82 = vmul.f32 %v74, -48.020004
  %v83 = vmul.f32 %v75, -48.020004
  %v84 = vmul.f32 %v76, -48.020004
  %v85 = vmul.f32 %v77, -48.020004
  %v86 = vmul.f32 %v78, -48.020004
  %v87 = vmul.f32 %v79, 1.442695
  %v88 = vpow.pop %v87
  %v89 = vmul.f32 %v80, 1.442695
  %v90 = vpow.pop %v89
  %v91 = vmul.f32 %v81, 1.442695
  %v92 = vpow.pop %v91
  %v93 = vmul.f32 %v82, 1.442695
  %v94 = vpow.pop %v93
  %v95 = vmul.f32 %v83, 1.442695
  %v96 = vpow.pop %v95
  %v97 = vmul.f32 %v84, 1.442695
  %v98 = vpow.pop %v97
  %v99 = vmul.f32 %v85, 1.442695
  %v100 = vpow.pop %v99
  %v101 = vmul.f32 %v86, 1.442695
  %v102 = vpow.pop %v101
  %vm103 = vcmask 408576
  %104 = vst.msk [vmem:[%s2] sm:$0xff] %vm103, %v88
  %105 = vst.msk [vmem:[%s2 + $0x8] sm:$0xff] %vm103, %v90
  %106 = vst.msk [vmem:[%s2 + $0x10] sm:$0xff] %vm103, %v92
  %107 = vst.msk [vmem:[%s2 + $0x18] sm:$0xff] %vm103, %v94
  %108 = vst.msk [vmem:[%s2 + $0x20] sm:$0xff] %vm103, %v96
  %109 = vst.msk [vmem:[%s2 + $0x28] sm:$0xff] %vm103, %v98
  %110 = vst.msk [vmem:[%s2 + $0x30] sm:$0xff] %vm103, %v100
  %111 = vst.msk [vmem:[%s2 + $0x38] sm:$0xff] %vm103, %v102
  // Predicated region
  $region10: #{tpu_custom_call.1} parent=0 // pred_check
    _
  $region11: #{tpu_custom_call.1} parent=0 // pred_check_branch
    %113 = sbr.rel (0) target = $region13
  $region12: #{tpu_custom_call.1} parent=0 // pred_region
    _
  $region13: #{tpu_custom_call.1} parent=0 // pred_fallthru
    _
  // Predicated region
  $region14: #{tpu_custom_call.1} parent=0 // pred_check
    _
  $region15: #{tpu_custom_call.1} parent=0 // pred_check_branch
    %115 = sbr.rel (0) target = $region17
  $region16: #{tpu_custom_call.1} parent=0 // pred_region
    _
  $region17: #{tpu_custom_call.1} parent=0 // pred_fallthru
    _

</llo_original>
